<compile_context>
chip_gen: v7x
topology: tpu7x:2x2x1
jax: 0.10.0
libtpu: 0.0.40
codegen_flags: <defaults>
</compile_context>

<pallas_src>
import math
import numpy as np
import jax
import jax.numpy as jnp
from jax.experimental import pallas as pl
from jax.experimental.pallas import tpu as pltpu

_VMEM_LIMIT = 32 * 1024 * 1024   # explicit budget; largest tile set is ~5 MiB


def _round_up(x, m):
    return (x + m - 1) // m * m


# ----------------------------------------------------------------------------
# Pallas kernels
# ----------------------------------------------------------------------------
def _gemm_ep_kernel(a_ref, b_ref, s_ref, c_ref, al_ref, o_ref):
    # out = act(A @ B * scale + shift), act(t) = where(t>=0, t, alpha*t)
    acc = jnp.dot(a_ref[...], b_ref[...], preferred_element_type=jnp.float32)
    t = acc * s_ref[...] + c_ref[...]
    o_ref[...] = jnp.where(t >= 0.0, t, al_ref[...] * t)


def _gemm_ep_res_kernel(a_ref, b_ref, s_ref, c_ref, al_ref, r_ref, o_ref):
    acc = jnp.dot(a_ref[...], b_ref[...], preferred_element_type=jnp.float32)
    t = acc * s_ref[...] + c_ref[...]
    t = jnp.where(t >= 0.0, t, al_ref[...] * t)
    o_ref[...] = t + r_ref[...]


def _affine_kernel(x_ref, s_ref, b_ref, o_ref):
    o_ref[...] = x_ref[...] * s_ref[...] + b_ref[...]


# ----------------------------------------------------------------------------
# Fused (grouped) GEMM wrapper
# ----------------------------------------------------------------------------
def fused_gemm(a, b, scale=None, shift=None, alpha=None, residual=None):
    """out = act(A @ B * scale + shift) [+ residual]     (f32 output)

    a: (M, K) or (Ga, M, K) with Ga in {1, G} (Ga==1 -> shared across the group)
    b: (K, N) or (G, K, N)
    scale/shift/alpha: None, scalar, (N,) or (G, N)
    residual: None, (M, N) or (G, M, N)
    """
    squeeze = (a.ndim == 2 and b.ndim == 2)
    a3 = a if a.ndim == 3 else a[None]
    b3 = b if b.ndim == 3 else b[None]
    Ga, M, K = a3.shape
    G, Kb, N = b3.shape
    assert K == Kb and Ga in (1, G)

    def _prep(p, default):
        p = jnp.asarray(default if p is None else p, jnp.float32)
        if p.ndim == 0:
            return jnp.full((1, 1, N), p, jnp.float32)
        if p.ndim == 1:
            return p.reshape(1, 1, N)
        return p.reshape(p.shape[0], 1, N)

    s = _prep(scale, 1.0)
    c = _prep(shift, 0.0)
    al = _prep(alpha, 1.0)

    # tiles: full K in one step, lane-dense N blocks, minimal M padding
    tm = 128 if M >= 128 else _round_up(M, 8)
    Mp = _round_up(M, tm)
    if N >= 128:
        tn = 128
        Np = _round_up(N, tn)
    else:
        tn = N            # block dim == full array dim -> legal, no padding
        Np = N

    a_p = a3.astype(jnp.bfloat16)
    b_p = b3.astype(jnp.bfloat16)
    if Mp != M:
        a_p = jnp.pad(a_p, ((0, 0), (0, Mp - M), (0, 0)))
    if Np != N:
        b_p = jnp.pad(b_p, ((0, 0), (0, 0), (0, Np - N)))
        s = jnp.pad(s, ((0, 0), (0, 0), (0, Np - N)))
        c = jnp.pad(c, ((0, 0), (0, 0), (0, Np - N)))
        al = jnp.pad(al, ((0, 0), (0, 0), (0, Np - N)), constant_values=1.0)

    a_map = (lambda g, i, j: (0, i, 0)) if Ga == 1 else (lambda g, i, j: (g, i, 0))

    def _p_map(arr):
        if arr.shape[0] == 1:
            return lambda g, i, j: (0, 0, j)
        return lambda g, i, j: (g, 0, j)

    in_specs = [
        pl.BlockSpec((None, tm, K), a_map),
        pl.BlockSpec((None, K, tn), lambda g, i, j: (g, 0, j)),
        pl.BlockSpec((None, 1, tn), _p_map(s)),
        pl.BlockSpec((None, 1, tn), _p_map(c)),
        pl.BlockSpec((None, 1, tn), _p_map(al)),
    ]
    args = [a_p, b_p, s, c, al]
    kernel = _gemm_ep_kernel
    if residual is not None:
        r3 = residual if residual.ndim == 3 else residual[None]
        r3 = r3.astype(jnp.float32)
        if Mp != M or Np != N:
            r3 = jnp.pad(r3, ((0, 0), (0, Mp - M), (0, Np - N)))
        in_specs.append(pl.BlockSpec((None, tm, tn), lambda g, i, j: (g, i, j)))
        args.append(r3)
        kernel = _gemm_ep_res_kernel

    out = pl.pallas_call(
        kernel,
        out_shape=jax.ShapeDtypeStruct((G, Mp, Np), jnp.float32),
        grid=(G, Mp // tm, Np // tn),
        in_specs=in_specs,
        out_specs=pl.BlockSpec((None, tm, tn), lambda g, i, j: (g, i, j)),
        compiler_params=pltpu.CompilerParams(
            dimension_semantics=("parallel", "parallel", "parallel"),
            vmem_limit_bytes=_VMEM_LIMIT),
    )(*args)
    out = out[:, :M, :N]
    return out[0] if squeeze else out


# ----------------------------------------------------------------------------
# Tiled element-wise BatchNorm (only standalone element-wise op left)
# ----------------------------------------------------------------------------
def batchnorm_nhwc(x, scale, shift):
    B, H, W, C = x.shape
    M = B * H * W
    x2 = x.reshape(M, C).astype(jnp.float32)
    s = jnp.asarray(scale, jnp.float32).reshape(1, C)
    b = jnp.asarray(shift, jnp.float32).reshape(1, C)
    # repack narrow-channel maps into a lane-dense (M/r, 128) slab
    reps = 1
    while C * reps * 2 <= 128 and M % (reps * 2) == 0:
        reps *= 2
    if reps > 1:
        M, Cc = M // reps, C * reps
        x2 = x2.reshape(M, Cc)
        s = jnp.tile(s, (1, reps))
        b = jnp.tile(b, (1, reps))
    else:
        Cc = C
    rows = 512 if M >= 512 else _round_up(M, 8)
    Mp = _round_up(M, rows)
    if Mp != M:
        x2 = jnp.pad(x2, ((0, Mp - M), (0, 0)))
    out = pl.pallas_call(
        _affine_kernel,
        out_shape=jax.ShapeDtypeStruct((Mp, Cc), jnp.float32),
        grid=(Mp // rows,),
        in_specs=[pl.BlockSpec((rows, Cc), lambda i: (i, 0)),
                  pl.BlockSpec((1, Cc), lambda i: (0, 0)),
                  pl.BlockSpec((1, Cc), lambda i: (0, 0))],
        out_specs=pl.BlockSpec((rows, Cc), lambda i: (i, 0)),
        compiler_params=pltpu.CompilerParams(
            dimension_semantics=("parallel",),
            vmem_limit_bytes=_VMEM_LIMIT),
    )(x2, s, b)
    return out[:M].reshape(B, H, W, C)


# ----------------------------------------------------------------------------
# Conv / upsample built on the fused GEMM
# ----------------------------------------------------------------------------
def _im2col(x, kh, kw, stride, padding):
    """NHWC -> (B*OH*OW, kh*kw*C) patch matrix in bf16 (MXU input dtype)."""
    # TODO(synk): fully fusing im2col into the GEMM (tap axis in the grid reading
    # shifted windows) needs element-offset BlockSpecs / manual DMA; patches are
    # built at the XLA level in bf16 instead to halve the HBM round trip.
    B, H, W, C = x.shape
    x = x.astype(jnp.bfloat16)
    if padding:
        x = jnp.pad(x, ((0, 0), (padding, padding), (padding, padding), (0, 0)))
    OH = (H + 2 * padding - kh) // stride + 1
    OW = (W + 2 * padding - kw) // stride + 1
    cols = []
    for ki in range(kh):
        for kj in range(kw):
            cols.append(x[:, ki: ki + stride * (OH - 1) + 1: stride,
                           kj: kj + stride * (OW - 1) + 1: stride, :])
    patches = jnp.concatenate(cols, axis=-1).reshape(B * OH * OW, kh * kw * C)
    return patches, OH, OW


def conv2d_fused(x, w, stride=1, padding=0,
                 scale=None, shift=None, alpha=None, residual=None):
    """Conv2d (NHWC, weight (kh,kw,cin,cout)) with fused per-channel epilogue."""
    B, H, W, C = x.shape
    kh, kw, cin, cout = w.shape
    assert cin == C
    if kh == 1 and kw == 1 and padding == 0:
        xs = x if stride == 1 else x[:, ::stride, ::stride, :]
        _, OH, OW, _ = xs.shape
        patches = xs.reshape(B * OH * OW, C).astype(jnp.bfloat16)
    else:
        patches, OH, OW = _im2col(x, kh, kw, stride, padding)
    wm = w.reshape(kh * kw * cin, cout)
    r2 = None if residual is None else residual.reshape(B * OH * OW, cout)
    out = fused_gemm(patches, wm, scale, shift, alpha, r2)
    return out.reshape(B, OH, OW, cout)


def _interp_matrix(out_size, in_size):
    """Bilinear (align_corners=True) 1-D interpolation matrix (out, in)."""
    M = np.zeros((out_size, in_size), np.float32)
    for i in range(out_size):
        src = 0.0 if out_size == 1 else i * (in_size - 1) / (out_size - 1)
        i0 = min(int(np.floor(src)), in_size - 1)
        i1 = min(i0 + 1, in_size - 1)
        f = src - i0
        M[i, i0] += 1.0 - f
        M[i, i1] += f
    return M


def upsample_bilinear(x, H, W):
    """align_corners=True bilinear resize of a tiny NHWC map (XLA glue)."""
    _, h, w, _ = x.shape
    Rh = jnp.asarray(_interp_matrix(H, h))
    Rw = jnp.asarray(_interp_matrix(W, w))
    return jnp.einsum('Hh,bhwc,Ww->bHWc', Rh, x.astype(jnp.float32), Rw)


# ----------------------------------------------------------------------------
# Deterministic synthetic parameters
# ----------------------------------------------------------------------------
class KeyGen:
    def __init__(self, key):
        self.key, self.i = key, 0

    def __call__(self):
        k = jax.random.fold_in(self.key, self.i)
        self.i += 1
        return k


def conv_weight(kg, kh, kw, cin, cout):
    std = math.sqrt(2.0 / (kh * kw * cin))
    w = jax.random.normal(kg(), (kh, kw, cin, cout), jnp.float32) * std
    return w.astype(jnp.bfloat16)          # MXU operand dtype


def bn_params(c, eps=1e-5):
    gamma, beta = jnp.ones((c,), jnp.float32), jnp.zeros((c,), jnp.float32)
    mean, var = jnp.zeros((c,), jnp.float32), jnp.ones((c,), jnp.float32)
    scale = gamma / jnp.sqrt(var + eps)
    shift = beta - mean * scale
    return scale, shift


def init_params(kg, stylegan_size=1024):
    p = {}
    # input layer: Conv2d(3,64,3,1,1,bias=False) -> BN(64) -> PReLU(64)
    p['input_conv'] = conv_weight(kg, 3, 3, 3, 64)
    p['input_bn'] = bn_params(64)
    p['input_prelu'] = jnp.full((64,), 0.25, jnp.float32)

    # body: IR-50 bottleneck_IR blocks
    cfgs = []
    for in_c, depth, n in [(64, 64, 3), (64, 128, 4), (128, 256, 14), (256, 512, 3)]:
        cfgs.append((in_c, depth, 2))
        cfgs += [(depth, depth, 1)] * (n - 1)
    body = []
    for in_c, depth, stride in cfgs:
        blk = {'in_c': in_c, 'depth': depth, 'stride': stride}
        if in_c != depth:
            blk['sc_w'] = conv_weight(kg, 1, 1, in_c, depth)
            blk['sc_bn'] = bn_params(depth)
        blk['bn1'] = bn_params(in_c)
        blk['w1'] = conv_weight(kg, 3, 3, in_c, depth)
        blk['prelu'] = jnp.full((depth,), 0.25, jnp.float32)
        blk['w2'] = conv_weight(kg, 3, 3, depth, depth)
        blk['bn2'] = bn_params(depth)
        body.append(blk)
    p['body'] = body

    # styles (18 GradualStyleBlocks), generated per-style then stacked per group
    log_size = int(math.log2(stylegan_size))
    style_count = 2 * log_size - 2
    assert style_count == 18          # forward() hard-codes range(1, 18)
    styles = []
    for i in range(style_count):
        spatial = 16 if i < 3 else (32 if i < 7 else 64)
        num_pools = int(np.log2(spatial))
        convs = []
        for _ in range(num_pools):
            convs.append({
                'w': conv_weight(kg, 3, 3, 512, 512),
                'b': jax.random.normal(kg(), (512,), jnp.float32) * 0.01,
            })
        lin_w = jax.random.normal(kg(), (512, 512), jnp.float32)  # (out, in)
        styles.append({'convs': convs,
                       'lin_wt': lin_w.T.astype(jnp.bfloat16),    # (in, out)
                       'lin_b': jnp.zeros((512,), jnp.float32)})

    def stack_group(idx):
        grp = [styles[i] for i in idx]
        n_lvl = len(grp[0]['convs'])
        return {
            'conv_w': [jnp.stack([g['convs'][l]['w'] for g in grp]
                                 ).reshape(len(grp), 9 * 512, 512)
                       for l in range(n_lvl)],
            'conv_b': [jnp.stack([g['convs'][l]['b'] for g in grp])
                       for l in range(n_lvl)],
            'lin_wt': jnp.stack([g['lin_wt'] for g in grp]),
            'lin_b': jnp.stack([g['lin_b'] for g in grp]),
            'lin_scale': 1.0 / math.sqrt(512),     # EqualLinear scale, lr_mul=1
        }

    p['style_groups'] = [stack_group(range(0, 3)),     # styles 0-2  <- c3
                         stack_group(range(3, 7)),     # styles 3-6  <- p2
                         stack_group(range(7, 18))]    # styles 7-17 <- p1

    # lateral 1x1 convs (with bias)
    p['lat1_w'] = conv_weight(kg, 1, 1, 256, 512)
    p['lat1_b'] = jax.random.normal(kg(), (512,), jnp.float32) * 0.01
    p['lat2_w'] = conv_weight(kg, 1, 1, 128, 512)
    p['lat2_b'] = jax.random.normal(kg(), (512,), jnp.float32) * 0.01
    return p


# ----------------------------------------------------------------------------
# Modules
# ----------------------------------------------------------------------------
def bottleneck_ir(x, blk):
    stride = blk['stride']
    # shortcut
    if 'sc_w' in blk:
        ss, sb = blk['sc_bn']
        sc = conv2d_fused(x, blk['sc_w'], stride=stride, padding=0,
                          scale=ss, shift=sb)                       # 1x1 conv + BN
    else:
        sc = x if stride == 1 else x[:, ::stride, ::stride, :]      # MaxPool2d(1, stride)
    # residual branch: BN -> conv3x3(s1)+PReLU -> conv3x3(stride)+BN (+ shortcut)
    s1, b1 = blk['bn1']
    r = batchnorm_nhwc(x, s1, b1)
    r = conv2d_fused(r, blk['w1'], stride=1, padding=1, alpha=blk['prelu'])
    s2, b2 = blk['bn2']
    return conv2d_fused(r, blk['w2'], stride=stride, padding=1,
                        scale=s2, shift=b2, residual=sc)


def run_style_group(feat, gp, batch):
    """Run a whole group of GradualStyleBlocks sharing `feat`.  -> (G, batch, 512)."""
    C = 512
    G = gp['lin_b'].shape[0]
    leaky = 0.01                       # nn.LeakyReLU() default slope
    x = feat
    out = None
    OH = OW = None
    for l, (w_l, b_l) in enumerate(zip(gp['conv_w'], gp['conv_b'])):
        patches, OH, OW = _im2col(x, 3, 3, 2, 1)
        if l == 0:
            a = patches[None]                                  # shared across group
        else:
            a = patches.reshape(G, batch * OH * OW, 9 * C)
        out = fused_gemm(a, w_l, None, b_l, leaky)             # conv + bias + LeakyReLU
        x = out.reshape(G * batch, OH, OW, C)
    assert OH == 1 and OW == 1
    lin_in = out.reshape(G, batch, C)
    # EqualLinear: (x @ W.T) * (1/sqrt(512)) + b
    return fused_gemm(lin_in, gp['lin_wt'], gp['lin_scale'], gp['lin_b'])


def encoder4editing_forward(params, x_nchw):
    """x_nchw: (B, 3, H, W) float32 -> w: (B, 18, 512) float32."""
    batch = x_nchw.shape[0]
    x = jnp.transpose(x_nchw.astype(jnp.float32), (0, 2, 3, 1))     # NHWC
    # input layer: conv + BN + PReLU, fully fused
    ibs, ibb = params['input_bn']
    x = conv2d_fused(x, params['input_conv'], stride=1, padding=1,
                     scale=ibs, shift=ibb, alpha=params['input_prelu'])
    # body with feature taps
    c1 = c2 = c3 = None
    for i, blk in enumerate(params['body']):
        x = bottleneck_ir(x, blk)
        if i == 6:
            c1 = x
        elif i == 20:
            c2 = x
        elif i == 23:
            c3 = x
    # styles 0-2 on c3 (batched)
    g0 = run_style_group(c3, params['style_groups'][0], batch)      # (3, B, 512)
    w0 = g0[0]
    # p2 = upsample(c3) + latlayer1(c2)  (add folded into the lateral conv epilogue)
    up3 = upsample_bilinear(c3, c2.shape[1], c2.shape[2])
    p2 = conv2d_fused(c2, params['lat1_w'], stride=1, padding=0,
                      shift=params['lat1_b'], residual=up3)
    g1 = run_style_group(p2, params['style_groups'][1], batch)      # (4, B, 512)
    # p1 = upsample(p2) + latlayer2(c1)
    up2 = upsample_bilinear(p2, c1.shape[1], c1.shape[2])
    p1 = conv2d_fused(c1, params['lat2_w'], stride=1, padding=0,
                      shift=params['lat2_b'], residual=up2)
    g2 = run_style_group(p1, params['style_groups'][2], batch)      # (11, B, 512)
    # w[:, 0] = w0 ; w[:, i] = w0 + delta_i for i = 1..17
    deltas = jnp.concatenate([g0[1:], g1, g2], axis=0)              # (17, B, 512)
    w = jnp.concatenate([w0[None], w0[None] + deltas], axis=0)      # (18, B, 512)
    return jnp.transpose(w, (1, 0, 2))


# ----------------------------------------------------------------------------
if __name__ == "__main__":
    # small but structurally consistent input: batch=2, 3x64x64 (NCHW like PyTorch)
    # -> c1: 16x16x128, c2: 8x8x256, c3: 4x4x512
    batch = 2
    x = jax.random.normal(jax.random.PRNGKey(0), (batch, 3, 64, 64), jnp.float32)

    params = init_params(KeyGen(jax.random.PRNGKey(42)), stylegan_size=1024)

    w = encoder4editing_forward(params, x)
    w = jax.block_until_ready(w)

    assert w.shape == (batch, 18, 512), w.shape
    assert w.dtype == jnp.float32
    assert bool(jnp.all(jnp.isfinite(w)))
    print("KERNEL_OK")
</pallas_src>

<mosaic_0001>
module attributes {stable_mosaic.version = 11 : i64} {
  func.func @_gemm_ep_kernel(%arg0: i32, %arg1: i32, %arg2: i32, %arg3: memref<1x128x27xbf16, #tpu.memory_space<vmem>>, %arg4: memref<1x27x64xbf16, #tpu.memory_space<vmem>>, %arg5: memref<1x1x64xf32, #tpu.memory_space<vmem>>, %arg6: memref<1x1x64xf32, #tpu.memory_space<vmem>>, %arg7: memref<1x1x64xf32, #tpu.memory_space<vmem>>, %arg8: memref<1x128x64xf32, #tpu.memory_space<vmem>>) attributes {dimension_semantics = [#tpu.dimension_semantics<parallel>, #tpu.dimension_semantics<parallel>, #tpu.dimension_semantics<parallel>], iteration_bounds = array<i64: 1, 64, 1>, scalar_prefetch = 0 : i64, scratch_operands = 0 : i64, tpu.core_type = #tpu.core_type<tc>, window_params = [{transform_indices = @transform_0, window_bounds = array<i64: 1, 128, 27>}, {transform_indices = @transform_1, window_bounds = array<i64: 1, 27, 64>}, {transform_indices = @transform_2, window_bounds = array<i64: 1, 1, 64>}, {transform_indices = @transform_3, window_bounds = array<i64: 1, 1, 64>}, {transform_indices = @transform_4, window_bounds = array<i64: 1, 1, 64>}, {transform_indices = @transform_5, window_bounds = array<i64: 1, 128, 64>}]} {
    %c0 = arith.constant 0 : index
    %c0_0 = arith.constant 0 : index
    %c0_1 = arith.constant 0 : index
    %0 = vector.load %arg3[%c0, %c0_0, %c0_1] : memref<1x128x27xbf16, #tpu.memory_space<vmem>>, vector<1x128x27xbf16>
    %1 = vector.shape_cast %0 : vector<1x128x27xbf16> to vector<128x27xbf16>
    %c0_2 = arith.constant 0 : index
    %c0_3 = arith.constant 0 : index
    %c0_4 = arith.constant 0 : index
    %2 = vector.load %arg4[%c0_2, %c0_3, %c0_4] : memref<1x27x64xbf16, #tpu.memory_space<vmem>>, vector<1x27x64xbf16>
    %3 = vector.shape_cast %2 : vector<1x27x64xbf16> to vector<27x64xbf16>
    %cst = arith.constant dense<0.000000e+00> : vector<128x64xf32>
    %4 = tpu.matmul %1, %3, %cst {dimension_numbers = #tpu.dot_dimension_numbers<[1], [0], [0], [1], [0, 0, 1, 1], [], []>} : vector<128x27xbf16>, vector<27x64xbf16>, vector<128x64xf32> -> vector<128x64xf32>
    %c0_5 = arith.constant 0 : index
    %c0_6 = arith.constant 0 : index
    %c0_7 = arith.constant 0 : index
    %5 = vector.load %arg5[%c0_5, %c0_6, %c0_7] : memref<1x1x64xf32, #tpu.memory_space<vmem>>, vector<1x1x64xf32>
    %6 = vector.shape_cast %5 : vector<1x1x64xf32> to vector<1x64xf32>
    %7 = vector.broadcast %6 : vector<1x64xf32> to vector<128x64xf32>
    %8 = arith.mulf %4, %7 : vector<128x64xf32>
    %c0_8 = arith.constant 0 : index
    %c0_9 = arith.constant 0 : index
    %c0_10 = arith.constant 0 : index
    %9 = vector.load %arg6[%c0_8, %c0_9, %c0_10] : memref<1x1x64xf32, #tpu.memory_space<vmem>>, vector<1x1x64xf32>
    %10 = vector.shape_cast %9 : vector<1x1x64xf32> to vector<1x64xf32>
    %11 = vector.broadcast %10 : vector<1x64xf32> to vector<128x64xf32>
    %12 = arith.addf %8, %11 : vector<128x64xf32>
    %cst_11 = arith.constant 0.000000e+00 : f32
    %13 = vector.broadcast %cst_11 : f32 to vector<128x64xf32>
    %14 = arith.cmpf oge, %12, %13 : vector<128x64xf32>
    %c0_12 = arith.constant 0 : index
    %c0_13 = arith.constant 0 : index
    %c0_14 = arith.constant 0 : index
    %15 = vector.load %arg7[%c0_12, %c0_13, %c0_14] : memref<1x1x64xf32, #tpu.memory_space<vmem>>, vector<1x1x64xf32>
    %16 = vector.shape_cast %15 : vector<1x1x64xf32> to vector<1x64xf32>
    %17 = vector.broadcast %16 : vector<1x64xf32> to vector<128x64xf32>
    %18 = arith.mulf %17, %12 : vector<128x64xf32>
    %19 = arith.select %14, %12, %18 : vector<128x64xi1>, vector<128x64xf32>
    %c0_15 = arith.constant 0 : index
    %c0_16 = arith.constant 0 : index
    %c0_17 = arith.constant 0 : index
    %20 = vector.load %arg8[%c0_15, %c0_16, %c0_17] : memref<1x128x64xf32, #tpu.memory_space<vmem>>, vector<1x128x64xf32>
    %21 = vector.shape_cast %20 : vector<1x128x64xf32> to vector<128x64xf32>
    %22 = vector.shape_cast %19 : vector<128x64xf32> to vector<1x128x64xf32>
    tpu.vector_store %arg8[%c0_15, %c0_16, %c0_17], %22 {strides = array<i32>} : memref<1x128x64xf32, #tpu.memory_space<vmem>>, vector<1x128x64xf32>,
    return
  }
  func.func @transform_0(%arg0: i32, %arg1: i32, %arg2: i32) -> (i32, i32, i32) {
    %c0_i32 = arith.constant 0 : i32
    %c0_i32_0 = arith.constant 0 : i32
    %c0_i32_1 = arith.constant 0 : i32
    return %c0_i32, %arg1, %c0_i32_0 : i32, i32, i32
  }
  func.func @transform_1(%arg0: i32, %arg1: i32, %arg2: i32) -> (i32, i32, i32) {
    %c0_i32 = arith.constant 0 : i32
    %c0_i32_0 = arith.constant 0 : i32
    return %arg0, %c0_i32, %arg2 : i32, i32, i32
  }
  func.func @transform_2(%arg0: i32, %arg1: i32, %arg2: i32) -> (i32, i32, i32) {
    %c0_i32 = arith.constant 0 : i32
    %c0_i32_0 = arith.constant 0 : i32
    %c0_i32_1 = arith.constant 0 : i32
    return %c0_i32, %c0_i32_0, %arg2 : i32, i32, i32
  }
  func.func @transform_3(%arg0: i32, %arg1: i32, %arg2: i32) -> (i32, i32, i32) {
    %c0_i32 = arith.constant 0 : i32
    %c0_i32_0 = arith.constant 0 : i32
    %c0_i32_1 = arith.constant 0 : i32
    return %c0_i32, %c0_i32_0, %arg2 : i32, i32, i32
  }
  func.func @transform_4(%arg0: i32, %arg1: i32, %arg2: i32) -> (i32, i32, i32) {
    %c0_i32 = arith.constant 0 : i32
    %c0_i32_0 = arith.constant 0 : i32
    %c0_i32_1 = arith.constant 0 : i32
    return %c0_i32, %c0_i32_0, %arg2 : i32, i32, i32
  }
  func.func @transform_5(%arg0: i32, %arg1: i32, %arg2: i32) -> (i32, i32, i32) {
    %c0_i32 = arith.constant 0 : i32
    return %arg0, %arg1, %arg2 : i32, i32, i32
  }
}

</mosaic_0001>

<llo_original>
// kernel: tpu_custom_call.1
$region0: #{tpu_custom_call.1}
  #allocation0 [shape = 'u32[]', space=smem, size = 0x4, offset = 0x4, fixed_abs, tag = 'smem constant byte address 0x4 - core index']
  #allocation1 [shape = 'u32[144,128]{1,0:T(1,128)}', space=vmem, size = 0x12000, scoped, tag = 'internal scratch']
  %s0 = inlined_call_operand.vmem [shape: bf16[1,8192,27], index: 0, kind: input, shape index: {}]
  %s1 = inlined_call_operand.vmem [shape: bf16[1,27,64], index: 1, kind: input, shape index: {}]
  %s2 = inlined_call_operand.vmem [shape: f32[1,1,64], index: 2, kind: input, shape index: {}]
  %s3 = inlined_call_operand.vmem [shape: f32[1,1,64], index: 3, kind: input, shape index: {}]
  %s4 = inlined_call_operand.vmem [shape: f32[1,1,64], index: 4, kind: input, shape index: {}]
  %s5 = inlined_call_operand.vmem [shape: f32[1,8192,64], index: 5, kind: output, shape index: {}]
  %s6 = sld [smem:[#allocation0]]
  $region53: #{tpu_custom_call.1} parent=0
    _
  %s8 = ssub.s32 1, %s6
  %s9 = scalar_select 0, %s8, %s6
  loop: start=0, step=1, limit=66
  $region2: #{tpu_custom_call.1} parent=0 // loop_pre_header
    _
  $region3: #{tpu_custom_call.1} parent=0 // loop_header
    %s11 = sphi 0, %s15
    %p12 = scmp.ge.s32.totalorder %s11, 66
    %s18 = sphi 0, %s37
    %s19 = sphi 0, %s33
    %s20 = sphi 0, %s29
    %s21 = sphi 0, %s18
    %s22 = sphi 0, %s19
    %s23 = sphi 0, %s20
    %s24 = sphi 0, %s21
    %s25 = sphi 0, %s22
    %s26 = sphi 0, %s23
    %s40 = sphi 0, %s42
    %s43 = sphi 0, %s40
    %s44 = sphi 0, %s43
    %s60 = sphi 0, %s44
    %s68 = sphi 0, %s70
    %s71 = sphi 0, %s68
    %s72 = sphi 0, %s71
    %s88 = sphi 0, %s72
    %s94 = sphi 0, %s96
    %s97 = sphi 0, %s94
    %s98 = sphi 0, %s97
    %s114 = sphi 0, %s98
    %s120 = sphi 0, %s122
    %s123 = sphi 0, %s120
    %s124 = sphi 0, %s123
    %s140 = sphi 0, %s124
    %s146 = sphi 0, %s148
    %s149 = sphi 0, %s146
    %s150 = sphi 0, %s149
    %s166 = sphi 0, %s150
    %s176 = sphi 0, %s178
    %s179 = sphi 0, %s176
    %s180 = sphi 0, %s179
    %s196 = sphi 0, %s180
  $region4: #{tpu_custom_call.1} parent=0 // loop_header_branch
    %14 = sbr.rel (%p12) target = $region8
  $region5: #{tpu_custom_call.1} parent=0 // loop_body
    %s16 = ssub.s32 %s11, 1
    %s17 = ssub.s32 %s11, 2
    %s27 = sadd.s32 1, %s20
    %p28 = scmp.ge.s32.totalorder %s27, 1
    %s29 = scalar_select %p28, 0, %s27
    %s30 = sadd.s32 1, %s19
    %s31 = scalar_select %p28, %s30, %s19
    %p32 = scmp.ge.s32.totalorder %s31, 64
    %s33 = scalar_select %p32, 0, %s31
    %s34 = sadd.s32 1, %s18
    %s35 = scalar_select %p32, %s34, %s18
    %p36 = scmp.ge.s32.totalorder %s35, 1
    %s37 = scalar_select %p36, 0, %s35
    %s38 = ssub.s32 %s19, %s33
    %p39 = scmp.eq.s32.totalorder %s38, 0
    %s41 = sadd.s32 %s40, 1
    %s42 = scalar_select %p39, %s40, %s41
    %p45 = pneg %p39
    %p46 = scmp.eq.s32.totalorder %s11, 63
    %p47 = por %p45, %p46
    %p48 = scmp.ne.s32.totalorder %s40, %s43
    %p49 = scmp.eq.s32.totalorder %s11, 0
    %p50 = por %p48, %p49
    %p51 = scmp.ne.s32.totalorder %s40, %s43
    %p52 = scmp.eq.s32.totalorder %s16, 63
    %p53 = por %p51, %p52
    %p54 = scmp.ne.s32.totalorder %s43, %s44
    %p55 = scmp.eq.s32.totalorder %s16, 0
    %p56 = por %p54, %p55
    %p57 = scmp.ne.s32.totalorder %s43, %s44
    %p58 = scmp.eq.s32.totalorder %s17, 63
    %p59 = por %p57, %p58
    %p61 = scmp.ne.s32.totalorder %s44, %s60
    %p62 = scmp.eq.s32.totalorder %s17, 0
    %p63 = por %p61, %p62
    %s64 = ssub.s32 %s18, %s37
    %s65 = ssub.s32 %s20, %s29
    %s66 = sor.u32 %s64, %s65
    %p67 = scmp.eq.s32.totalorder %s66, 0
    %s69 = sadd.s32 %s68, 1
    %s70 = scalar_select %p67, %s68, %s69
    %p73 = pneg %p67
    %p74 = scmp.eq.s32.totalorder %s11, 63
    %p75 = por %p73, %p74
    %p76 = scmp.ne.s32.totalorder %s68, %s71
    %p77 = scmp.eq.s32.totalorder %s11, 0
    %p78 = por %p76, %p77
    %p79 = scmp.ne.s32.totalorder %s68, %s71
    %p80 = scmp.eq.s32.totalorder %s16, 63
    %p81 = por %p79, %p80
    %p82 = scmp.ne.s32.totalorder %s71, %s72
    %p83 = scmp.eq.s32.totalorder %s16, 0
    %p84 = por %p82, %p83
    %p85 = scmp.ne.s32.totalorder %s71, %s72
    %p86 = scmp.eq.s32.totalorder %s17, 63
    %p87 = por %p85, %p86
    %p89 = scmp.ne.s32.totalorder %s72, %s88
    %p90 = scmp.eq.s32.totalorder %s17, 0
    %p91 = por %p89, %p90
    %s92 = ssub.s32 %s20, %s29
    %p93 = scmp.eq.s32.totalorder %s92, 0
    %s95 = sadd.s32 %s94, 1
    %s96 = scalar_select %p93, %s94, %s95
    %p99 = pneg %p93
    %p100 = scmp.eq.s32.totalorder %s11, 63
    %p101 = por %p99, %p100
    %p102 = scmp.ne.s32.totalorder %s94, %s97
    %p103 = scmp.eq.s32.totalorder %s11, 0
    %p104 = por %p102, %p103
    %p105 = scmp.ne.s32.totalorder %s94, %s97
    %p106 = scmp.eq.s32.totalorder %s16, 63
    %p107 = por %p105, %p106
    %p108 = scmp.ne.s32.totalorder %s97, %s98
    %p109 = scmp.eq.s32.totalorder %s16, 0
    %p110 = por %p108, %p109
    %p111 = scmp.ne.s32.totalorder %s97, %s98
    %p112 = scmp.eq.s32.totalorder %s17, 63
    %p113 = por %p111, %p112
    %p115 = scmp.ne.s32.totalorder %s98, %s114
    %p116 = scmp.eq.s32.totalorder %s17, 0
    %p117 = por %p115, %p116
    %s118 = ssub.s32 %s20, %s29
    %p119 = scmp.eq.s32.totalorder %s118, 0
    %s121 = sadd.s32 %s120, 1
    %s122 = scalar_select %p119, %s120, %s121
    %p125 = pneg %p119
    %p126 = scmp.eq.s32.totalorder %s11, 63
    %p127 = por %p125, %p126
    %p128 = scmp.ne.s32.totalorder %s120, %s123
    %p129 = scmp.eq.s32.totalorder %s11, 0
    %p130 = por %p128, %p129
    %p131 = scmp.ne.s32.totalorder %s120, %s123
    %p132 = scmp.eq.s32.totalorder %s16, 63
    %p133 = por %p131, %p132
    %p134 = scmp.ne.s32.totalorder %s123, %s124
    %p135 = scmp.eq.s32.totalorder %s16, 0
    %p136 = por %p134, %p135
    %p137 = scmp.ne.s32.totalorder %s123, %s124
    %p138 = scmp.eq.s32.totalorder %s17, 63
    %p139 = por %p137, %p138
    %p141 = scmp.ne.s32.totalorder %s124, %s140
    %p142 = scmp.eq.s32.totalorder %s17, 0
    %p143 = por %p141, %p142
    %s144 = ssub.s32 %s20, %s29
    %p145 = scmp.eq.s32.totalorder %s144, 0
    %s147 = sadd.s32 %s146, 1
    %s148 = scalar_select %p145, %s146, %s147
    %p151 = pneg %p145
    %p152 = scmp.eq.s32.totalorder %s11, 63
    %p153 = por %p151, %p152
    %p154 = scmp.ne.s32.totalorder %s146, %s149
    %p155 = scmp.eq.s32.totalorder %s11, 0
    %p156 = por %p154, %p155
    %p157 = scmp.ne.s32.totalorder %s146, %s149
    %p158 = scmp.eq.s32.totalorder %s16, 63
    %p159 = por %p157, %p158
    %p160 = scmp.ne.s32.totalorder %s149, %s150
    %p161 = scmp.eq.s32.totalorder %s16, 0
    %p162 = por %p160, %p161
    %p163 = scmp.ne.s32.totalorder %s149, %s150
    %p164 = scmp.eq.s32.totalorder %s17, 63
    %p165 = por %p163, %p164
    %p167 = scmp.ne.s32.totalorder %s150, %s166
    %p168 = scmp.eq.s32.totalorder %s17, 0
    %p169 = por %p167, %p168
    %s170 = ssub.s32 %s18, %s37
    %s171 = ssub.s32 %s19, %s33
    %s172 = sor.u32 %s170, %s171
    %s173 = ssub.s32 %s20, %s29
    %s174 = sor.u32 %s172, %s173
    %p175 = scmp.eq.s32.totalorder %s174, 0
    %s177 = sadd.s32 %s176, 1
    %s178 = scalar_select %p175, %s176, %s177
    %p181 = pneg %p175
    %p182 = scmp.eq.s32.totalorder %s11, 63
    %p183 = por %p181, %p182
    %p184 = scmp.ne.s32.totalorder %s176, %s179
    %p185 = scmp.eq.s32.totalorder %s11, 0
    %p186 = por %p184, %p185
    %p187 = scmp.ne.s32.totalorder %s176, %s179
    %p188 = scmp.eq.s32.totalorder %s16, 63
    %p189 = por %p187, %p188
    %p190 = scmp.ne.s32.totalorder %s179, %s180
    %p191 = scmp.eq.s32.totalorder %s16, 0
    %p192 = por %p190, %p191
    %p193 = scmp.ne.s32.totalorder %s179, %s180
    %p194 = scmp.eq.s32.totalorder %s17, 63
    %p195 = por %p193, %p194
    %p197 = scmp.ne.s32.totalorder %s180, %s196
    %p198 = scmp.eq.s32.totalorder %s17, 0
    %p199 = por %p197, %p198
    %p200 = scmp.le.s32.totalorder 1, %s11
    %p201 = scmp.lt.s32.totalorder %s11, 65
    %p202 = pnand %p200, %p201
    %p203 = pneg %p202
    // Predicated region
    $region9: #{tpu_custom_call.1} parent=5 // pred_check
      _
    $region10: #{tpu_custom_call.1} parent=5 // pred_check_branch
      %205 = sbr.rel (%p202) target = $region12
    $region11: #{tpu_custom_call.1} parent=5 // pred_region
      %s206 = ssub.s32 %s11, 1
      // Predicated region
      $region13: #{tpu_custom_call.1} parent=11 // pred_check
        %p207 = pneg %p84
      $region14: #{tpu_custom_call.1} parent=11 // pred_check_branch
        %209 = sbr.rel (%p207) target = $region16
      $region15: #{tpu_custom_call.1} parent=11 // pred_region
        %p210 = scmp.lt.s32.totalorder %s21, 0
        %s211 = scalar_select %p210, %s21, 0
        %p212 = scmp.lt.s32.totalorder %s23, 0
        %s213 = scalar_select %p212, %s23, 0
        %s214 = smul.addr %s211, 4
        %s215 = sadd.s32 %s213, %s214
        %s216 = smul.addr %s215, 4
        %s217 = scalar_lea.vmem %s1, %s216
      $region16: #{tpu_custom_call.1} parent=11 // pred_fallthru
        _
      // Predicated region
      $region17: #{tpu_custom_call.1} parent=11 // pred_check
        %p218 = pneg %p110
      $region18: #{tpu_custom_call.1} parent=11 // pred_check_branch
        %220 = sbr.rel (%p218) target = $region20
      $region19: #{tpu_custom_call.1} parent=11 // pred_region
        %p221 = scmp.lt.s32.totalorder %s23, 0
        %s222 = scalar_select %p221, %s23, 0
        %s223 = scalar_lea.vmem %s2, %s222
      $region20: #{tpu_custom_call.1} parent=11 // pred_fallthru
        _
      // Predicated region
      $region21: #{tpu_custom_call.1} parent=11 // pred_check
        %p224 = pneg %p136
      $region22: #{tpu_custom_call.1} parent=11 // pred_check_branch
        %226 = sbr.rel (%p224) target = $region24
      $region23: #{tpu_custom_call.1} parent=11 // pred_region
        %p227 = scmp.lt.s32.totalorder %s23, 0
        %s228 = scalar_select %p227, %s23, 0
        %s229 = scalar_lea.vmem %s3, %s228
      $region24: #{tpu_custom_call.1} parent=11 // pred_fallthru
        _
      // Predicated region
      $region25: #{tpu_custom_call.1} parent=11 // pred_check
        %p230 = pneg %p162
      $region26: #{tpu_custom_call.1} parent=11 // pred_check_branch
        %232 = sbr.rel (%p230) target = $region28
      $region27: #{tpu_custom_call.1} parent=11 // pred_region
        %p233 = scmp.lt.s32.totalorder %s23, 0
        %s234 = scalar_select %p233, %s23, 0
        %s235 = scalar_lea.vmem %s4, %s234
      $region28: #{tpu_custom_call.1} parent=11 // pred_fallthru
        _
    $region12: #{tpu_custom_call.1} parent=5 // pred_fallthru
      _
    %p236 = scmp.lt.s32.totalorder %s11, 64
    // Predicated region
    $region29: #{tpu_custom_call.1} parent=5 // pred_check
      %p237 = pneg %p236
    $region30: #{tpu_custom_call.1} parent=5 // pred_check_branch
      %239 = sbr.rel (%p237) target = $region32
    $region31: #{tpu_custom_call.1} parent=5 // pred_region
      // Predicated region
      $region33: #{tpu_custom_call.1} parent=31 // pred_check
        %p240 = pneg %p50
      $region34: #{tpu_custom_call.1} parent=31 // pred_check_branch
        %242 = sbr.rel (%p240) target = $region36
      $region35: #{tpu_custom_call.1} parent=31 // pred_region
        %s243 = smul.u32 16, %s19
        %p244 = scmp.lt.s32.totalorder %s243, 1023
        %s245 = scalar_select %p244, %s243, 1023
        %s246 = smul.addr %s245, 4
        %s247 = scalar_lea.vmem %s0, %s246
        %s248 = smul.u32 16, %s19
      $region36: #{tpu_custom_call.1} parent=31 // pred_fallthru
        _
    $region32: #{tpu_custom_call.1} parent=5 // pred_fallthru
      _
    %p249 = scmp.le.s32.totalorder 1, %s11
    %p250 = scmp.lt.s32.totalorder %s11, 65
    %p251 = pnand %p249, %p250
    %p252 = pneg %p251
    // Predicated region
    $region37: #{tpu_custom_call.1} parent=5 // pred_check
      _
    $region38: #{tpu_custom_call.1} parent=5 // pred_check_branch
      %254 = sbr.rel (%p251) target = $region40
    $region39: #{tpu_custom_call.1} parent=5 // pred_region
      %s255 = ssub.s32 %s11, 1
      %s256 = smul.u32 16, %s22
      %p257 = scmp.lt.s32.totalorder %s256, 1023
      %s258 = scalar_select %p257, %s256, 1023
      %s259 = smul.addr %s258, 4
      %s260 = scalar_lea.vmem %s0, %s259
      %p261 = pneg %p56
      %p262 = pneg %p53
      %p263 = scmp.lt.s32.totalorder %s21, 0
      %s264 = scalar_select %p263, %s21, 0
      %p265 = scmp.lt.s32.totalorder %s23, 0
      %s266 = scalar_select %p265, %s23, 0
      %s267 = smul.addr %s264, 4
      %s268 = sadd.s32 %s266, %s267
      %s269 = smul.addr %s268, 4
      %s270 = scalar_lea.vmem %s1, %s269
      %p271 = pneg %p84
      %p272 = pneg %p81
      %p273 = scmp.lt.s32.totalorder %s23, 0
      %s274 = scalar_select %p273, %s23, 0
      %s275 = scalar_lea.vmem %s2, %s274
      %p276 = pneg %p110
      %p277 = pneg %p107
      %p278 = scmp.lt.s32.totalorder %s23, 0
      %s279 = scalar_select %p278, %s23, 0
      %s280 = scalar_lea.vmem %s3, %s279
      %p281 = pneg %p136
      %p282 = pneg %p133
      %p283 = scmp.lt.s32.totalorder %s23, 0
      %s284 = scalar_select %p283, %s23, 0
      %s285 = scalar_lea.vmem %s4, %s284
      %p286 = pneg %p162
      %p287 = pneg %p159
      %p288 = pneg %p192
      %p289 = pneg %p189
      %s290 = smul.u32 16, %s22
      %p291 = scmp.lt.s32.totalorder %s21, 0
      %s292 = scalar_select %p291, %s21, 0
      %p293 = scmp.lt.s32.totalorder %s290, 1023
      %s294 = scalar_select %p293, %s290, 1023
      %p295 = scmp.lt.s32.totalorder %s23, 0
      %s296 = scalar_select %p295, %s23, 0
      %s297 = sadd.s32 %s296, %s294
      %s298 = smul.addr %s292, 1024
      %s299 = sadd.s32 %s297, %s298
      %s300 = smul.addr %s299, 8
      %s301 = scalar_lea.vmem %s5, %s300
      %s302 = smul.u32 16, %s22
      %p303 = scmp.lt.s32.totalorder %s302, 1023
      %s304 = scalar_select %p303, %s302, 1023
      %s305 = smul.addr %s304, 4
      %s306 = scalar_lea.vmem %s0, %s305
      %s307 = smul.u32 16, %s22
      %p308 = scmp.lt.s32.totalorder %s21, 0
      %s309 = scalar_select %p308, %s21, 0
      %p310 = scmp.lt.s32.totalorder %s23, 0
      %s311 = scalar_select %p310, %s23, 0
      %s312 = smul.addr %s309, 4
      %s313 = sadd.s32 %s311, %s312
      %s314 = smul.addr %s313, 4
      %s315 = scalar_lea.vmem %s1, %s314
      %p316 = scmp.lt.s32.totalorder %s23, 0
      %s317 = scalar_select %p316, %s23, 0
      %s318 = scalar_lea.vmem %s2, %s317
      %p319 = scmp.lt.s32.totalorder %s23, 0
      %s320 = scalar_select %p319, %s23, 0
      %s321 = scalar_lea.vmem %s3, %s320
      %p322 = scmp.lt.s32.totalorder %s23, 0
      %s323 = scalar_select %p322, %s23, 0
      %s324 = scalar_lea.vmem %s4, %s323
      %s325 = smul.u32 16, %s22
      %p326 = scmp.lt.s32.totalorder %s21, 0
      %s327 = scalar_select %p326, %s21, 0
      %p328 = scmp.lt.s32.totalorder %s325, 1023
      %s329 = scalar_select %p328, %s325, 1023
      %p330 = scmp.lt.s32.totalorder %s23, 0
      %s331 = scalar_select %p330, %s23, 0
      %s332 = sadd.s32 %s331, %s329
      %s333 = smul.addr %s327, 1024
      %s334 = sadd.s32 %s332, %s333
      %s335 = smul.addr %s334, 8
      %s336 = scalar_lea.vmem %s5, %s335
      %s337 = smul.u32 16, %s22
      %v339 = vld [vmem:[%s306] sm:$0xf]
      %v340 = vld [vmem:[%s306 + $0x4] sm:$0xf]
      %v341 = vld [vmem:[%s306 + $0x8] sm:$0xf]
      %v342 = vld [vmem:[%s306 + $0xc] sm:$0xf]
      %v343 = vld [vmem:[%s306 + $0x10] sm:$0xf]
      %v344 = vld [vmem:[%s306 + $0x14] sm:$0xf]
      %v345 = vld [vmem:[%s306 + $0x18] sm:$0xf]
      %v346 = vld [vmem:[%s306 + $0x1c] sm:$0xf]
      %v347 = vld [vmem:[%s306 + $0x20] sm:$0xf]
      %v348 = vld [vmem:[%s306 + $0x24] sm:$0xf]
      %v349 = vld [vmem:[%s306 + $0x28] sm:$0xf]
      %v350 = vld [vmem:[%s306 + $0x2c] sm:$0xf]
      %v351 = vld [vmem:[%s306 + $0x30] sm:$0xf]
      %v352 = vld [vmem:[%s306 + $0x34] sm:$0xf]
      %v353 = vld [vmem:[%s306 + $0x38] sm:$0xf]
      %v354 = vld [vmem:[%s306 + $0x3c] sm:$0xf]
      %v355 = vld [vmem:[%s315] sm:$0xf]
      %v356 = vld [vmem:[%s315 + $0x4] sm:$0xf]
      %v357 = vld [vmem:[%s315 + $0x8] sm:$0xf]
      %v358 = vld [vmem:[%s315 + $0xc] sm:$0x3]
      %v375 = vunpack.c.l.b16 %v339
      %v376 = vunpack.c.l.b16 %v340
      %v377 = vunpack.c.l.b16 %v341
      %v378 = vunpack.c.l.b16 %v342
      %v379 = vunpack.c.l.b16 %v343
      %v380 = vunpack.c.l.b16 %v344
      %v381 = vunpack.c.l.b16 %v345
      %v382 = vunpack.c.l.b16 %v346
      %v383 = vunpack.c.l.b16 %v347
      %v384 = vunpack.c.l.b16 %v348
      %v385 = vunpack.c.l.b16 %v349
      %v386 = vunpack.c.l.b16 %v350
      %v387 = vunpack.c.l.b16 %v351
      %v388 = vunpack.c.l.b16 %v352
      %v389 = vunpack.c.l.b16 %v353
      %v390 = vunpack.c.l.b16 %v354
      %v391 = vpack.c.b16 %v376, %v375
      %v392 = vpack.c.b16 %v378, %v377
      %v393 = vpack.c.b16 %v380, %v379
      %v394 = vpack.c.b16 %v382, %v381
      %v395 = vpack.c.b16 %v384, %v383
      %v396 = vpack.c.b16 %v386, %v385
      %v397 = vpack.c.b16 %v388, %v387
      %v398 = vpack.c.b16 %v390, %v389
      %v403 = vunpack.c.l.b16 %v355
      %v404 = vunpack.c.l.b16 %v356
      %v405 = vunpack.c.l.b16 %v357
      %v406 = vunpack.c.l.b16 %v358
      %v407 = vpack.c.b16 %v404, %v403
      %v408 = vpack.c.b16 %v406, %v405
      %vm410 = vcmask 220160
      %v412 = vsel %vm410, %v391, 0
      %v415 = vsel %vm410, %v392, 0
      %v418 = vsel %vm410, %v393, 0
      %v421 = vsel %vm410, %v394, 0
      %v424 = vsel %vm410, %v395, 0
      %v427 = vsel %vm410, %v396, 0
      %v430 = vsel %vm410, %v397, 0
      %v433 = vsel %vm410, %v398, 0
      %vm435 = vcmask 1044480
      %vm436 = vcmask 1045504
      %v437 = vsel %vm435, 4294967295, 65535
      %v438 = vsel %vm436, %v437, 0
      %v440 = vand.u32 %v408, %v438
      %442 = vmatprep.subr.bf16.mxu0 0
      %443 = vmatpush1.bf16.msra.mxu0 %v407
      %444 = vmatprep.subr.bf16.mxu0 0
      %445 = vmatpush1.bf16.msra.mxu0 %v440
      %446 = vmatprep.subr.bf16.mxu0 0
      %447 = vmatpush1.bf16.msra.mxu0 0
      %448 = vmatprep.subr.bf16.mxu0 0
      %449 = vmatpush1.bf16.msra.mxu0 0
      %450 = vmatprep.subr.bf16.mxu0 0
      %451 = vmatpush1.bf16.msra.mxu0 0
      %452 = vmatprep.subr.bf16.mxu0 0
      %453 = vmatpush1.bf16.msra.mxu0 0
      %454 = vmatprep.subr.bf16.mxu0 0
      %455 = vmatpush1.bf16.msra.mxu0 0
      %456 = vmatprep.subr.bf16.mxu0 0
      %457 = vmatpush1.bf16.msra.mxu0 0
      %458 = vmatprep.subr.bf16.mxu0 0
      %459 = vmatpush1.bf16.msra.mxu0 0
      %460 = vmatprep.subr.bf16.mxu0 0
      %461 = vmatpush1.bf16.msra.mxu0 0
      %462 = vmatprep.subr.bf16.mxu0 0
      %463 = vmatpush1.bf16.msra.mxu0 0
      %464 = vmatprep.subr.bf16.mxu0 0
      %465 = vmatpush1.bf16.msra.mxu0 0
      %466 = vmatprep.subr.bf16.mxu0 0
      %467 = vmatpush1.bf16.msra.mxu0 0
      %468 = vmatprep.subr.bf16.mxu0 0
      %469 = vmatpush1.bf16.msra.mxu0 0
      %470 = vmatprep.subr.bf16.mxu0 0
      %471 = vmatpush1.bf16.msra.mxu0 0
      %472 = vmatprep.subr.bf16.mxu0 0
      %473 = vmatpush1.bf16.msra.mxu0 0
      %474 = vmatprep.mubr.bf16.mxu0 0
      %475 = vmatmul.mubr.bf16.gmra.mrb[0].mxu0 %v412
      %v476 = vpop.f32.mrb[0].mxu0
      %v477 = vadd.f32 0.0, %v476
      %v478 = vpop.f32.mrb[0].mxu0
      %v479 = vpop.f32.mrb[0].mxu0
      %v480 = vadd.f32 0.0, %v479
      %v481 = vpop.f32.mrb[0].mxu0
      %482 = vmatprep.mubr.bf16.mxu0 0
      %483 = vmatmul.mubr.bf16.gmra.mrb[0].mxu0 %v415
      %v484 = vpop.f32.mrb[0].mxu0
      %v485 = vadd.f32 0.0, %v484
      %v486 = vpop.f32.mrb[0].mxu0
      %v487 = vpop.f32.mrb[0].mxu0
      %v488 = vadd.f32 0.0, %v487
      %v489 = vpop.f32.mrb[0].mxu0
      %490 = vmatprep.mubr.bf16.mxu0 0
      %491 = vmatmul.mubr.bf16.gmra.mrb[0].mxu0 %v418
      %v492 = vpop.f32.mrb[0].mxu0
      %v493 = vadd.f32 0.0, %v492
      %v494 = vpop.f32.mrb[0].mxu0
      %v495 = vpop.f32.mrb[0].mxu0
      %v496 = vadd.f32 0.0, %v495
      %v497 = vpop.f32.mrb[0].mxu0
      %498 = vmatprep.mubr.bf16.mxu0 0
      %499 = vmatmul.mubr.bf16.gmra.mrb[0].mxu0 %v421
      %v500 = vpop.f32.mrb[0].mxu0
      %v501 = vadd.f32 0.0, %v500
      %v502 = vpop.f32.mrb[0].mxu0
      %v503 = vpop.f32.mrb[0].mxu0
      %v504 = vadd.f32 0.0, %v503
      %v505 = vpop.f32.mrb[0].mxu0
      %506 = vmatprep.mubr.bf16.mxu0 0
      %507 = vmatmul.mubr.bf16.gmra.mrb[0].mxu0 %v424
      %v508 = vpop.f32.mrb[0].mxu0
      %v509 = vadd.f32 0.0, %v508
      %v510 = vpop.f32.mrb[0].mxu0
      %v511 = vpop.f32.mrb[0].mxu0
      %v512 = vadd.f32 0.0, %v511
      %v513 = vpop.f32.mrb[0].mxu0
      %514 = vmatprep.mubr.bf16.mxu0 0
      %515 = vmatmul.mubr.bf16.gmra.mrb[0].mxu0 %v427
      %v516 = vpop.f32.mrb[0].mxu0
      %v517 = vadd.f32 0.0, %v516
      %v518 = vpop.f32.mrb[0].mxu0
      %v519 = vpop.f32.mrb[0].mxu0
      %v520 = vadd.f32 0.0, %v519
      %v521 = vpop.f32.mrb[0].mxu0
      %522 = vmatprep.mubr.bf16.mxu0 0
      %523 = vmatmul.mubr.bf16.gmra.mrb[0].mxu0 %v430
      %v524 = vpop.f32.mrb[0].mxu0
      %v525 = vadd.f32 0.0, %v524
      %v526 = vpop.f32.mrb[0].mxu0
      %v527 = vpop.f32.mrb[0].mxu0
      %v528 = vadd.f32 0.0, %v527
      %v529 = vpop.f32.mrb[0].mxu0
      %530 = vmatprep.mubr.bf16.mxu0 0
      %531 = vmatmul.mubr.bf16.gmra.mrb[0].mxu0 %v433
      %v532 = vpop.f32.mrb[0].mxu0
      %v533 = vadd.f32 0.0, %v532
      %v534 = vpop.f32.mrb[0].mxu0
      %v535 = vpop.f32.mrb[0].mxu0
      %v536 = vadd.f32 0.0, %v535
      %v537 = vpop.f32.mrb[0].mxu0
      %538 = vdwg.mxu0
      %v539 = vld [vmem:[%s318] sm:$0x1]
      %v541 = vlaneseq
      %v542 = vshrl.u32 %v541, 7
      %v543 = vsub.s32 0, %v542
      %v544 = vrot.slane %v539, %v543
      %v546 = vmul.f32 %v477, %v544
      %v547 = vmul.f32 %v480, %v544
      %v548 = vmul.f32 %v485, %v544
      %v549 = vmul.f32 %v488, %v544
      %v550 = vmul.f32 %v493, %v544
      %v551 = vmul.f32 %v496, %v544
      %v552 = vmul.f32 %v501, %v544
      %v553 = vmul.f32 %v504, %v544
      %v554 = vmul.f32 %v509, %v544
      %v555 = vmul.f32 %v512, %v544
      %v556 = vmul.f32 %v517, %v544
      %v557 = vmul.f32 %v520, %v544
      %v558 = vmul.f32 %v525, %v544
      %v559 = vmul.f32 %v528, %v544
      %v560 = vmul.f32 %v533, %v544
      %v561 = vmul.f32 %v536, %v544
      %v562 = vld [vmem:[%s321] sm:$0x1]
      %v564 = vlaneseq
      %v565 = vshrl.u32 %v564, 7
      %v566 = vsub.s32 0, %v565
      %v567 = vrot.slane %v562, %v566
      %v569 = vadd.f32 %v546, %v567
      %v570 = vadd.f32 %v547, %v567
      %v571 = vadd.f32 %v548, %v567
      %v572 = vadd.f32 %v549, %v567
      %v573 = vadd.f32 %v550, %v567
      %v574 = vadd.f32 %v551, %v567
      %v575 = vadd.f32 %v552, %v567
      %v576 = vadd.f32 %v553, %v567
      %v577 = vadd.f32 %v554, %v567
      %v578 = vadd.f32 %v555, %v567
      %v579 = vadd.f32 %v556, %v567
      %v580 = vadd.f32 %v557, %v567
      %v581 = vadd.f32 %v558, %v567
      %v582 = vadd.f32 %v559, %v567
      %v583 = vadd.f32 %v560, %v567
      %v584 = vadd.f32 %v561, %v567
      %vm585 = vcmp.ge.f32.partialorder %v569, 0.0
      %vm586 = vcmp.ge.f32.partialorder %v570, 0.0
      %vm587 = vcmp.ge.f32.partialorder %v571, 0.0
      %vm588 = vcmp.ge.f32.partialorder %v572, 0.0
      %vm589 = vcmp.ge.f32.partialorder %v573, 0.0
      %vm590 = vcmp.ge.f32.partialorder %v574, 0.0
      %vm591 = vcmp.ge.f32.partialorder %v575, 0.0
      %vm592 = vcmp.ge.f32.partialorder %v576, 0.0
      %vm593 = vcmp.ge.f32.partialorder %v577, 0.0
      %vm594 = vcmp.ge.f32.partialorder %v578, 0.0
      %vm595 = vcmp.ge.f32.partialorder %v579, 0.0
      %vm596 = vcmp.ge.f32.partialorder %v580, 0.0
      %vm597 = vcmp.ge.f32.partialorder %v581, 0.0
      %vm598 = vcmp.ge.f32.partialorder %v582, 0.0
      %vm599 = vcmp.ge.f32.partialorder %v583, 0.0
      %vm600 = vcmp.ge.f32.partialorder %v584, 0.0
      %v601 = vld [vmem:[%s324] sm:$0x1]
      %v603 = vlaneseq
      %v604 = vshrl.u32 %v603, 7
      %v605 = vsub.s32 0, %v604
      %v606 = vrot.slane %v601, %v605
      %v608 = vmul.f32 %v606, %v569
      %v609 = vmul.f32 %v606, %v570
      %v610 = vmul.f32 %v606, %v571
      %v611 = vmul.f32 %v606, %v572
      %v612 = vmul.f32 %v606, %v573
      %v613 = vmul.f32 %v606, %v574
      %v614 = vmul.f32 %v606, %v575
      %v615 = vmul.f32 %v606, %v576
      %v616 = vmul.f32 %v606, %v577
      %v617 = vmul.f32 %v606, %v578
      %v618 = vmul.f32 %v606, %v579
      %v619 = vmul.f32 %v606, %v580
      %v620 = vmul.f32 %v606, %v581
      %v621 = vmul.f32 %v606, %v582
      %v622 = vmul.f32 %v606, %v583
      %v623 = vmul.f32 %v606, %v584
      %v624 = vsel %vm585, %v569, %v608
      %v625 = vsel %vm586, %v570, %v609
      %v626 = vsel %vm587, %v571, %v610
      %v627 = vsel %vm588, %v572, %v611
      %v628 = vsel %vm589, %v573, %v612
      %v629 = vsel %vm590, %v574, %v613
      %v630 = vsel %vm591, %v575, %v614
      %v631 = vsel %vm592, %v576, %v615
      %v632 = vsel %vm593, %v577, %v616
      %v633 = vsel %vm594, %v578, %v617
      %v634 = vsel %vm595, %v579, %v618
      %v635 = vsel %vm596, %v580, %v619
      %v636 = vsel %vm597, %v581, %v620
      %v637 = vsel %vm598, %v582, %v621
      %v638 = vsel %vm599, %v583, %v622
      %v639 = vsel %vm600, %v584, %v623
      %vm640 = vcmask 523264
      %641 = vst.msk [vmem:[%s336] sm:$0xff] %vm640, %v624
      %642 = vst.msk [vmem:[%s336 + $0x8] sm:$0xff] %vm640, %v625
      %643 = vst.msk [vmem:[%s336 + $0x10] sm:$0xff] %vm640, %v626
      %644 = vst.msk [vmem:[%s336 + $0x18] sm:$0xff] %vm640, %v627
      %645 = vst.msk [vmem:[%s336 + $0x20] sm:$0xff] %vm640, %v628
      %646 = vst.msk [vmem:[%s336 + $0x28] sm:$0xff] %vm640, %v629
      %647 = vst.msk [vmem:[%s336 + $0x30] sm:$0xff] %vm640, %v630
      %648 = vst.msk [vmem:[%s336 + $0x38] sm:$0xff] %vm640, %v631
      %649 = vst.msk [vmem:[%s336 + $0x40] sm:$0xff] %vm640, %v632
      %650 = vst.msk [vmem:[%s336 + $0x48] sm:$0xff] %vm640, %v633
      %651 = vst.msk [vmem:[%s336 + $0x50] sm:$0xff] %vm640, %v634
      %652 = vst.msk [vmem:[%s336 + $0x58] sm:$0xff] %vm640, %v635
      %653 = vst.msk [vmem:[%s336 + $0x60] sm:$0xff] %vm640, %v636
      %654 = vst.msk [vmem:[%s336 + $0x68] sm:$0xff] %vm640, %v637
      %655 = vst.msk [vmem:[%s336 + $0x70] sm:$0xff] %vm640, %v638
      %656 = vst.msk [vmem:[%s336 + $0x78] sm:$0xff] %vm640, %v639
      %s657 = smul.u32 16, %s22
      %p658 = scmp.lt.s32.totalorder %s21, 0
      %s659 = scalar_select %p658, %s21, 0
      %p660 = scmp.lt.s32.totalorder %s657, 1023
      %s661 = scalar_select %p660, %s657, 1023
      %p662 = scmp.lt.s32.totalorder %s23, 0
      %s663 = scalar_select %p662, %s23, 0
      %s664 = sadd.s32 %s663, %s661
      %s665 = smul.addr %s659, 1024
      %s666 = sadd.s32 %s664, %s665
      %s667 = smul.addr %s666, 8
      %s668 = scalar_lea.vmem %s5, %s667
      // Predicated region
      $region41: #{tpu_custom_call.1} parent=39 // pred_check
        %p669 = pneg %p189
      $region42: #{tpu_custom_call.1} parent=39 // pred_check_branch
        %671 = sbr.rel (%p669) target = $region44
      $region43: #{tpu_custom_call.1} parent=39 // pred_region
        %s672 = smul.u32 16, %s22
      $region44: #{tpu_custom_call.1} parent=39 // pred_fallthru
        _
    $region40: #{tpu_custom_call.1} parent=5 // pred_fallthru
      _
    %p673 = scmp.le.s32.totalorder 2, %s11
    // Predicated region
    $region45: #{tpu_custom_call.1} parent=5 // pred_check
      %p674 = pneg %p673
    $region46: #{tpu_custom_call.1} parent=5 // pred_check_branch
      %676 = sbr.rel (%p674) target = $region48
    $region47: #{tpu_custom_call.1} parent=5 // pred_region
      %s677 = ssub.s32 %s11, 2
      // Predicated region
      $region49: #{tpu_custom_call.1} parent=47 // pred_check
        %p678 = pneg %p195
      $region50: #{tpu_custom_call.1} parent=47 // pred_check_branch
        %680 = sbr.rel (%p678) target = $region52
      $region51: #{tpu_custom_call.1} parent=47 // pred_region
        %s681 = smul.u32 16, %s25
        %p682 = scmp.lt.s32.totalorder %s24, 0
        %s683 = scalar_select %p682, %s24, 0
        %p684 = scmp.lt.s32.totalorder %s681, 1023
        %s685 = scalar_select %p684, %s681, 1023
        %p686 = scmp.lt.s32.totalorder %s26, 0
        %s687 = scalar_select %p686, %s26, 0
        %s688 = sadd.s32 %s687, %s685
        %s689 = smul.addr %s683, 1024
        %s690 = sadd.s32 %s688, %s689
        %s691 = smul.addr %s690, 8
        %s692 = scalar_lea.vmem %s5, %s691
      $region52: #{tpu_custom_call.1} parent=47 // pred_fallthru
        _
    $region48: #{tpu_custom_call.1} parent=5 // pred_fallthru
      _
  $region6: #{tpu_custom_call.1} parent=0 // loop_footer
    %s15 = sadd.s32 1, %s11
  $region7: #{tpu_custom_call.1} parent=0 // loop_footer_branch
    %10 = sbr.rel target = $region3
  $region8: #{tpu_custom_call.1} parent=0 // loop_exit
    _

</llo_original>
